<compile_context>
chip_gen: v6e
topology: v6e:2x2x1
jax: 0.10.0
libtpu: 0.0.40
codegen_flags: <defaults>
</compile_context>

<pallas_src>
import jax
import jax.numpy as jnp
from jax.experimental import pallas as pl
from jax.experimental.pallas import tpu as pltpu


def _make_kernel(step1_unsqueeze, step2_add):
    """Builds a fused kernel for the statically-selected branch combination."""

    def kernel(x_ref, o_ref):
        x = x_ref[...]
        if step1_unsqueeze:
            # torch.unsqueeze(x, 0): the leading unit dim is folded into the
            # broadcast below (and re-inserted by the wrapper's reshape).
            y = x
        else:
            # torch.transpose(x, 0, 1): one whole-tile XLU transpose
            # (minor/lane dim untouched), no per-row loop.
            y = jnp.swapaxes(x, 0, 1)

        if step2_add:
            # torch.add(x, x)
            o_ref[...] = y + y
        else:
            # torch.stack((x, x)): single broadcast store writes both copies.
            o_ref[...] = jnp.broadcast_to(y[None], o_ref.shape)

    return kernel


def model_forward(x):
    shape = tuple(x.shape)

    # --- Branch 1 (static shape check, same as the torch code) -------------
    step1_unsqueeze = shape[:2] == (2, 3)
    if step1_unsqueeze:
        y_shape = (1,) + shape                       # unsqueeze(x, 0)
    else:
        y_shape = (shape[1], shape[0]) + shape[2:]   # transpose(x, 0, 1)

    # --- Branch 2 (static shape check on the intermediate) -----------------
    step2_add = y_shape[:2] == (3, 4)
    final_shape = y_shape if step2_add else (2,) + y_shape

    # Shape the kernel output without the size-1 unsqueeze dim (the kernel
    # handles it via broadcasting); re-insert it with a free wrapper reshape.
    if step2_add:
        kernel_out_shape = y_shape                   # (unsqueeze+add is impossible)
    elif step1_unsqueeze:
        kernel_out_shape = (2,) + shape              # stack of the raw input
    else:
        kernel_out_shape = (2,) + y_shape            # stack of the transpose

    kernel = _make_kernel(step1_unsqueeze, step2_add)

    out = pl.pallas_call(
        kernel,
        out_shape=jax.ShapeDtypeStruct(kernel_out_shape, x.dtype),
        in_specs=[pl.BlockSpec(memory_space=pltpu.MemorySpace.VMEM)],
        out_specs=pl.BlockSpec(memory_space=pltpu.MemorySpace.VMEM),
    )(x)

    if out.shape != final_shape:
        out = out.reshape(final_shape)               # metadata-only
    return out


def model_forward_ref(x):
    """Pure-JAX reference mirroring the torch semantics."""
    if x.shape[:2] == (2, 3):
        x = x[None]
    else:
        x = jnp.swapaxes(x, 0, 1)
    if x.shape[:2] == (3, 4):
        x = x + x
    else:
        x = jnp.stack((x, x))
    return x


if __name__ == "__main__":
    key = jax.random.PRNGKey(0)
    # Shape from the original module spec: torch.randn(3, 4, 5)
    x = jax.random.normal(key, (3, 4, 5), dtype=jnp.float32)

    out = model_forward(x)
    out = jax.block_until_ready(out)

    ref = model_forward_ref(x)
    assert out.shape == (2, 4, 3, 5), out.shape
    assert out.dtype == jnp.float32, out.dtype
    assert jnp.allclose(out, ref), "mismatch vs reference"

    print("KERNEL_OK")
</pallas_src>

<mosaic_0001>
module attributes {stable_mosaic.version = 11 : i64} {
  func.func @kernel(%arg0: memref<3x4x5xf32, #tpu.memory_space<vmem>>, %arg1: memref<2x4x3x5xf32, #tpu.memory_space<vmem>>) attributes {dimension_semantics = [], scalar_prefetch = 0 : i64, scratch_operands = 0 : i64, tpu.core_type = #tpu.core_type<tc>} {
    %c0 = arith.constant 0 : index
    %c0_0 = arith.constant 0 : index
    %c0_1 = arith.constant 0 : index
    %0 = vector.load %arg0[%c0, %c0_0, %c0_1] : memref<3x4x5xf32, #tpu.memory_space<vmem>>, vector<3x4x5xf32>
    %1 = tpu.transpose %0, [1, 0, 2] : vector<3x4x5xf32> -> vector<4x3x5xf32>
    %2 = vector.shape_cast %1 : vector<4x3x5xf32> to vector<1x4x3x5xf32>
    %3 = vector.shape_cast %2 : vector<1x4x3x5xf32> to vector<1x4x3x5xf32>
    %4 = vector.broadcast %3 : vector<1x4x3x5xf32> to vector<2x4x3x5xf32>
    %c0_2 = arith.constant 0 : index
    %c0_3 = arith.constant 0 : index
    %c0_4 = arith.constant 0 : index
    %c0_5 = arith.constant 0 : index
    %5 = vector.load %arg1[%c0_2, %c0_3, %c0_4, %c0_5] : memref<2x4x3x5xf32, #tpu.memory_space<vmem>>, vector<2x4x3x5xf32>
    tpu.vector_store %arg1[%c0_2, %c0_3, %c0_4, %c0_5], %4 {strides = array<i32>} : memref<2x4x3x5xf32, #tpu.memory_space<vmem>>, vector<2x4x3x5xf32>,
    return
  }
}

</mosaic_0001>

<llo_original>
// kernel: tpu_custom_call.1
$region0: #{tpu_custom_call.1}
  #allocation0 [shape = 'u32[]', space=smem, size = 0x4, offset = 0x4, fixed_abs, tag = 'smem constant byte address 0x4 - core index']
  #allocation1 [shape = 'u32[144,128]{1,0:T(1,128)}', space=vmem, size = 0x12000, scoped, tag = 'internal scratch']
  %s0 = inlined_call_operand.hbm [shape: f32[3,4,5], index: 0, kind: input, shape index: {}]
  %s1 = inlined_call_operand.vmem [shape: f32[2,4,3,5], index: 1, kind: output, shape index: {}]
  %s2 = sld [smem:[#allocation0]]
  $region18: #{tpu_custom_call.1} parent=0
    _
  %s4 = ssub.s32 1, %s2
  %s5 = scalar_select 0, %s4, %s2
  $region1: #{tpu_custom_call.1} parent=0
    #allocation2 [shape = 'u8[6144]{0}', space=vmem, size = 0x1800, scoped, tag = 'input window, operand 0, single buffered']
    #allocation3 [shape = 's32[1]{0}', space=sflag, size = 0x4, scoped, tag = 'scoped memory for tpu_custom_call.1']
    %6 = vsyncpa [#allocation3], 0
    // Predicated region
    $region2: #{tpu_custom_call.1} parent=1 // pred_check
      _
    $region3: #{tpu_custom_call.1} parent=1 // pred_check_branch
      %8 = sbr.rel (0) target = $region5
    $region4: #{tpu_custom_call.1} parent=1 // pred_region
      %s10 = ssub.s32 192, 192
      %11 = vsyncadd [#allocation3], %s10
      %s12 = sshll.u32 [#allocation2], 4
      %s13 = int_to_ptr.vmem [resolvable:$true] %s12
      %18 = dma.hbm_to_vmem [thread:$0]  %s0, 192, %s13, [#allocation3], 64, 64, 4
    $region5: #{tpu_custom_call.1} parent=1 // pred_fallthru
      _
    // Predicated region
    $region6: #{tpu_custom_call.1} parent=1 // pred_check
      _
    $region7: #{tpu_custom_call.1} parent=1 // pred_check_branch
      %20 = sbr.rel (0) target = $region9
    $region8: #{tpu_custom_call.1} parent=1 // pred_region
      %21 = dma.done [#allocation3], 192
    $region9: #{tpu_custom_call.1} parent=1 // pred_fallthru
      _
    %v22 = vld [vmem:[#allocation2] sm:$0xf]
    %v23 = vld [vmem:[#allocation2 + $0x8] sm:$0xf]
    %v24 = vcombine.low %v22, %v23
    %v26 = vunpack.c.l.s4 1983009808
    %v27 = vunpack.c.0.s8 %v26
    %v28 = vlaneseq
    %v29 = vshrl.u32 %v28, 7
    %v30 = vsub.s32 %v27, %v29
    %v31 = vrot.slane %v24, %v30
    %v32 = vld [vmem:[#allocation2 + $0x4] sm:$0xf]
    %v34 = vunpack.c.l.s4 1983009808
    %v35 = vunpack.c.0.s8 %v34
    %v36 = vlaneseq
    %v37 = vshrl.u32 %v36, 7
    %v38 = vsub.s32 %v35, %v37
    %v39 = vrot.slane %v32, %v38
    %v40 = vcombine.low %v31, %v39
    %v41 = vcombine.high %v31, %v39
    %v43 = vunpack.c.l.s4 1934713408
    %v44 = vunpack.c.0.s8 %v43
    %v45 = vlaneseq
    %v46 = vshrl.u32 %v45, 7
    %v47 = vsub.s32 %v44, %v46
    %v48 = vrot.slane %v40, %v47
    %v50 = vunpack.c.l.s4 1934713408
    %v51 = vunpack.c.0.s8 %v50
    %v52 = vlaneseq
    %v53 = vshrl.u32 %v52, 7
    %v54 = vsub.s32 %v51, %v53
    %v55 = vrot.slane %v41, %v54
    %v56 = vcombine.high %v48, 0.0
    %v57 = vcombine.high %v55, 0.0
    %vm58 = vcmask 34816
    %59 = vst.msk [vmem:[%s1] sm:$0x7] %vm58, %v48
    %60 = vst.msk [vmem:[%s1 + $0x4] sm:$0x7] %vm58, %v56
    %61 = vst.msk [vmem:[%s1 + $0x8] sm:$0x7] %vm58, %v55
    %62 = vst.msk [vmem:[%s1 + $0xc] sm:$0x7] %vm58, %v57
    %63 = vst.msk [vmem:[%s1 + $0x10] sm:$0x7] %vm58, %v48
    %64 = vst.msk [vmem:[%s1 + $0x14] sm:$0x7] %vm58, %v56
    %65 = vst.msk [vmem:[%s1 + $0x18] sm:$0x7] %vm58, %v55
    %66 = vst.msk [vmem:[%s1 + $0x1c] sm:$0x7] %vm58, %v57
    // Predicated region
    $region10: #{tpu_custom_call.1} parent=1 // pred_check
      _
    $region11: #{tpu_custom_call.1} parent=1 // pred_check_branch
      %68 = sbr.rel (0) target = $region13
    $region12: #{tpu_custom_call.1} parent=1 // pred_region
      _
    $region13: #{tpu_custom_call.1} parent=1 // pred_fallthru
      _
    // Predicated region
    $region14: #{tpu_custom_call.1} parent=1 // pred_check
      _
    $region15: #{tpu_custom_call.1} parent=1 // pred_check_branch
      %70 = sbr.rel (0) target = $region17
    $region16: #{tpu_custom_call.1} parent=1 // pred_region
      _
    $region17: #{tpu_custom_call.1} parent=1 // pred_fallthru
      _
    %71 = vsyncpa [#allocation3], 1

</llo_original>
